<compile_context>
chip_gen: v6e
topology: v6e:2x2x1
jax: 0.10.0
libtpu: 0.0.40
codegen_flags: <defaults>
</compile_context>

<pallas_src>
import jax
import jax.numpy as jnp
from jax.experimental import pallas as pl
from jax.experimental.pallas import tpu as pltpu

LANE = 128
SUBLANE = 8


def glu_kernel(x_ref, w_ref, b_ref, o_ref):
    """Fused GLU block.

    x_ref / o_ref: (1, C, S_t, Ld) VMEM blocks (spatial pixels on sublane/lane).
    w_ref: (C, C) f32 in SMEM, PyTorch [out, in] layout (scalar reads).
    b_ref: (C,)  f32 in SMEM.
    """
    C = x_ref.shape[1]
    for o in range(C):
        x_o = x_ref[0, o].astype(jnp.float32)        # (S_t, Ld) dense tile
        gate = jax.nn.sigmoid(x_o)                   # EUP
        acc = x_o * w_ref[o, o]                      # VPU scalar*vector FMA
        for c in range(C):
            if c == o:
                continue
            acc = acc + x_ref[0, c].astype(jnp.float32) * w_ref[o, c]
        acc = acc + b_ref[o]
        o_ref[0, o] = (acc * gate).astype(o_ref.dtype)


def glu_forward(x_nchw, weight, bias, *, target_block_bytes=2 * 1024 * 1024):
    """GLU forward on NCHW input. weight: (C, C) PyTorch [out,in]; bias: (C,)."""
    N, C, H, W = x_nchw.shape
    HW = H * W

    # TODO(synk): for large C (>= ~128) route the channel mix through an MXU
    # matmul kernel instead of unrolled VPU FMAs.

    # Free contiguous reshape: spatial becomes (S, Ld) with Ld lane-dense.
    if HW % LANE == 0:
        S, Ld = HW // LANE, LANE
    else:
        S, Ld = 1, HW                      # full-extent last dim (legal block)
    x4 = x_nchw.reshape(N, C, S, Ld)

    # Largest sublane tile (multiple of 8, or full extent) within byte budget.
    itemsize = jnp.dtype(x_nchw.dtype).itemsize
    max_s = max(SUBLANE, target_block_bytes // (C * Ld * itemsize))
    if S <= max_s:
        S_t = S
    else:
        S_t = (max_s // SUBLANE) * SUBLANE
    grid = (N, pl.cdiv(S, S_t))

    block = (1, C, S_t, Ld)
    idx = lambda n, s: (n, 0, s, 0)

    out4 = pl.pallas_call(
        glu_kernel,
        out_shape=jax.ShapeDtypeStruct((N, C, S, Ld), x_nchw.dtype),
        grid_spec=pltpu.PrefetchScalarGridSpec(
            num_scalar_prefetch=0,
            grid=grid,
            in_specs=[
                pl.BlockSpec(block, idx),                            # x
                pl.BlockSpec(memory_space=pltpu.MemorySpace.SMEM),   # weight
                pl.BlockSpec(memory_space=pltpu.MemorySpace.SMEM),   # bias
            ],
            out_specs=pl.BlockSpec(block, idx),
        ),
        compiler_params=pltpu.CompilerParams(
            dimension_semantics=("parallel", "parallel"),
            vmem_limit_bytes=32 * 1024 * 1024,
        ),
    )(x4, weight.astype(jnp.float32), bias.astype(jnp.float32))

    return out4.reshape(N, C, H, W)


def glu_reference(x_nchw, weight, bias):
    x_nhwc = jnp.transpose(x_nchw, (0, 2, 3, 1))
    lin = jnp.einsum("nhwc,oc->nhwo", x_nhwc, weight) + bias
    lin = jnp.transpose(lin, (0, 3, 1, 2))
    return lin * jax.nn.sigmoid(x_nchw)


if __name__ == "__main__":
    key = jax.random.PRNGKey(0)
    k_x, k_w, k_b = jax.random.split(key, 3)

    N, C, H, W = 2, 4, 16, 16              # in_dim = C = 4
    x = jax.random.normal(k_x, (N, C, H, W), dtype=jnp.float32)

    # deterministic nn.Linear-style init: U(-1/sqrt(C), 1/sqrt(C))
    bound = 1.0 / (C ** 0.5)
    weight = jax.random.uniform(k_w, (C, C), jnp.float32, -bound, bound)
    bias = jax.random.uniform(k_b, (C,), jnp.float32, -bound, bound)

    glu_jit = jax.jit(glu_forward)
    out = glu_jit(x, weight, bias)
    out = jax.block_until_ready(out)

    ref = glu_reference(x, weight, bias)
    assert out.shape == (N, C, H, W)
    assert jnp.allclose(out, ref, atol=1e-5, rtol=1e-5), "mismatch vs reference"

    print("KERNEL_OK")
</pallas_src>

<mosaic_0001>
module attributes {stable_mosaic.version = 11 : i64} {
  func.func @glu_kernel(%arg0: i32, %arg1: i32, %arg2: memref<1x4x2x128xf32, #tpu.memory_space<vmem>>, %arg3: memref<4x4xf32, #tpu.memory_space<smem>>, %arg4: memref<4xf32, #tpu.memory_space<smem>>, %arg5: memref<1x4x2x128xf32, #tpu.memory_space<vmem>>) attributes {dimension_semantics = [#tpu.dimension_semantics<parallel>, #tpu.dimension_semantics<parallel>], iteration_bounds = array<i64: 2, 1>, scalar_prefetch = 0 : i64, scratch_operands = 0 : i64, tpu.core_type = #tpu.core_type<tc>, window_params = [{transform_indices = @transform_0, window_bounds = array<i64: 1, 4, 2, 128>}, {transform_indices = @transform_1, window_bounds = array<i64: 4, 4>}, {transform_indices = @transform_2, window_bounds = array<i64: 4>}, {transform_indices = @transform_3, window_bounds = array<i64: 1, 4, 2, 128>}]} {
    %c0 = arith.constant 0 : index
    %c0_0 = arith.constant 0 : index
    %c0_1 = arith.constant 0 : index
    %c0_2 = arith.constant 0 : index
    %0 = vector.load %arg2[%c0, %c0_0, %c0_1, %c0_2] : memref<1x4x2x128xf32, #tpu.memory_space<vmem>>, vector<1x1x2x128xf32>
    %1 = vector.shape_cast %0 : vector<1x1x2x128xf32> to vector<2x128xf32>
    %2 = arith.negf %1 : vector<2x128xf32>
    %3 = math.exp %2 : vector<2x128xf32>
    %cst = arith.constant 1.000000e+00 : f32
    %4 = vector.broadcast %cst : f32 to vector<2x128xf32>
    %5 = arith.addf %4, %3 : vector<2x128xf32>
    %6 = arith.divf %4, %5 : vector<2x128xf32>
    %c0_3 = arith.constant 0 : index
    %c0_4 = arith.constant 0 : index
    %7 = memref.load %arg3[%c0_3, %c0_4] : memref<4x4xf32, #tpu.memory_space<smem>>
    %8 = vector.broadcast %7 : f32 to vector<2x128xf32>
    %9 = arith.mulf %1, %8 : vector<2x128xf32>
    %c0_5 = arith.constant 0 : index
    %c1 = arith.constant 1 : index
    %c0_6 = arith.constant 0 : index
    %c0_7 = arith.constant 0 : index
    %10 = vector.load %arg2[%c0_5, %c1, %c0_6, %c0_7] : memref<1x4x2x128xf32, #tpu.memory_space<vmem>>, vector<1x1x2x128xf32>
    %11 = vector.shape_cast %10 : vector<1x1x2x128xf32> to vector<2x128xf32>
    %c0_8 = arith.constant 0 : index
    %c1_9 = arith.constant 1 : index
    %12 = memref.load %arg3[%c0_8, %c1_9] : memref<4x4xf32, #tpu.memory_space<smem>>
    %13 = vector.broadcast %12 : f32 to vector<2x128xf32>
    %14 = arith.mulf %11, %13 : vector<2x128xf32>
    %15 = arith.addf %9, %14 : vector<2x128xf32>
    %c0_10 = arith.constant 0 : index
    %c2 = arith.constant 2 : index
    %c0_11 = arith.constant 0 : index
    %c0_12 = arith.constant 0 : index
    %16 = vector.load %arg2[%c0_10, %c2, %c0_11, %c0_12] : memref<1x4x2x128xf32, #tpu.memory_space<vmem>>, vector<1x1x2x128xf32>
    %17 = vector.shape_cast %16 : vector<1x1x2x128xf32> to vector<2x128xf32>
    %c0_13 = arith.constant 0 : index
    %c2_14 = arith.constant 2 : index
    %18 = memref.load %arg3[%c0_13, %c2_14] : memref<4x4xf32, #tpu.memory_space<smem>>
    %19 = vector.broadcast %18 : f32 to vector<2x128xf32>
    %20 = arith.mulf %17, %19 : vector<2x128xf32>
    %21 = arith.addf %15, %20 : vector<2x128xf32>
    %c0_15 = arith.constant 0 : index
    %c3 = arith.constant 3 : index
    %c0_16 = arith.constant 0 : index
    %c0_17 = arith.constant 0 : index
    %22 = vector.load %arg2[%c0_15, %c3, %c0_16, %c0_17] : memref<1x4x2x128xf32, #tpu.memory_space<vmem>>, vector<1x1x2x128xf32>
    %23 = vector.shape_cast %22 : vector<1x1x2x128xf32> to vector<2x128xf32>
    %c0_18 = arith.constant 0 : index
    %c3_19 = arith.constant 3 : index
    %24 = memref.load %arg3[%c0_18, %c3_19] : memref<4x4xf32, #tpu.memory_space<smem>>
    %25 = vector.broadcast %24 : f32 to vector<2x128xf32>
    %26 = arith.mulf %23, %25 : vector<2x128xf32>
    %27 = arith.addf %21, %26 : vector<2x128xf32>
    %c0_20 = arith.constant 0 : index
    %28 = memref.load %arg4[%c0_20] : memref<4xf32, #tpu.memory_space<smem>>
    %29 = vector.broadcast %28 : f32 to vector<2x128xf32>
    %30 = arith.addf %27, %29 : vector<2x128xf32>
    %31 = arith.mulf %30, %6 : vector<2x128xf32>
    %c0_21 = arith.constant 0 : index
    %c0_22 = arith.constant 0 : index
    %c0_23 = arith.constant 0 : index
    %c0_24 = arith.constant 0 : index
    %32 = vector.load %arg5[%c0_21, %c0_22, %c0_23, %c0_24] : memref<1x4x2x128xf32, #tpu.memory_space<vmem>>, vector<1x1x2x128xf32>
    %33 = vector.shape_cast %32 : vector<1x1x2x128xf32> to vector<2x128xf32>
    %34 = vector.shape_cast %31 : vector<2x128xf32> to vector<1x1x2x128xf32>
    tpu.vector_store %arg5[%c0_21, %c0_22, %c0_23, %c0_24], %34 {strides = array<i32>} : memref<1x4x2x128xf32, #tpu.memory_space<vmem>>, vector<1x1x2x128xf32>,
    %c0_25 = arith.constant 0 : index
    %c1_26 = arith.constant 1 : index
    %c0_27 = arith.constant 0 : index
    %c0_28 = arith.constant 0 : index
    %35 = vector.load %arg2[%c0_25, %c1_26, %c0_27, %c0_28] : memref<1x4x2x128xf32, #tpu.memory_space<vmem>>, vector<1x1x2x128xf32>
    %36 = vector.shape_cast %35 : vector<1x1x2x128xf32> to vector<2x128xf32>
    %37 = arith.negf %36 : vector<2x128xf32>
    %38 = math.exp %37 : vector<2x128xf32>
    %cst_29 = arith.constant 1.000000e+00 : f32
    %39 = vector.broadcast %cst_29 : f32 to vector<2x128xf32>
    %40 = arith.addf %39, %38 : vector<2x128xf32>
    %41 = arith.divf %39, %40 : vector<2x128xf32>
    %c1_30 = arith.constant 1 : index
    %c1_31 = arith.constant 1 : index
    %42 = memref.load %arg3[%c1_30, %c1_31] : memref<4x4xf32, #tpu.memory_space<smem>>
    %43 = vector.broadcast %42 : f32 to vector<2x128xf32>
    %44 = arith.mulf %36, %43 : vector<2x128xf32>
    %c0_32 = arith.constant 0 : index
    %c0_33 = arith.constant 0 : index
    %c0_34 = arith.constant 0 : index
    %c0_35 = arith.constant 0 : index
    %45 = vector.load %arg2[%c0_32, %c0_33, %c0_34, %c0_35] : memref<1x4x2x128xf32, #tpu.memory_space<vmem>>, vector<1x1x2x128xf32>
    %46 = vector.shape_cast %45 : vector<1x1x2x128xf32> to vector<2x128xf32>
    %c1_36 = arith.constant 1 : index
    %c0_37 = arith.constant 0 : index
    %47 = memref.load %arg3[%c1_36, %c0_37] : memref<4x4xf32, #tpu.memory_space<smem>>
    %48 = vector.broadcast %47 : f32 to vector<2x128xf32>
    %49 = arith.mulf %46, %48 : vector<2x128xf32>
    %50 = arith.addf %44, %49 : vector<2x128xf32>
    %c0_38 = arith.constant 0 : index
    %c2_39 = arith.constant 2 : index
    %c0_40 = arith.constant 0 : index
    %c0_41 = arith.constant 0 : index
    %51 = vector.load %arg2[%c0_38, %c2_39, %c0_40, %c0_41] : memref<1x4x2x128xf32, #tpu.memory_space<vmem>>, vector<1x1x2x128xf32>
    %52 = vector.shape_cast %51 : vector<1x1x2x128xf32> to vector<2x128xf32>
    %c1_42 = arith.constant 1 : index
    %c2_43 = arith.constant 2 : index
    %53 = memref.load %arg3[%c1_42, %c2_43] : memref<4x4xf32, #tpu.memory_space<smem>>
    %54 = vector.broadcast %53 : f32 to vector<2x128xf32>
    %55 = arith.mulf %52, %54 : vector<2x128xf32>
    %56 = arith.addf %50, %55 : vector<2x128xf32>
    %c0_44 = arith.constant 0 : index
    %c3_45 = arith.constant 3 : index
    %c0_46 = arith.constant 0 : index
    %c0_47 = arith.constant 0 : index
    %57 = vector.load %arg2[%c0_44, %c3_45, %c0_46, %c0_47] : memref<1x4x2x128xf32, #tpu.memory_space<vmem>>, vector<1x1x2x128xf32>
    %58 = vector.shape_cast %57 : vector<1x1x2x128xf32> to vector<2x128xf32>
    %c1_48 = arith.constant 1 : index
    %c3_49 = arith.constant 3 : index
    %59 = memref.load %arg3[%c1_48, %c3_49] : memref<4x4xf32, #tpu.memory_space<smem>>
    %60 = vector.broadcast %59 : f32 to vector<2x128xf32>
    %61 = arith.mulf %58, %60 : vector<2x128xf32>
    %62 = arith.addf %56, %61 : vector<2x128xf32>
    %c1_50 = arith.constant 1 : index
    %63 = memref.load %arg4[%c1_50] : memref<4xf32, #tpu.memory_space<smem>>
    %64 = vector.broadcast %63 : f32 to vector<2x128xf32>
    %65 = arith.addf %62, %64 : vector<2x128xf32>
    %66 = arith.mulf %65, %41 : vector<2x128xf32>
    %c0_51 = arith.constant 0 : index
    %c1_52 = arith.constant 1 : index
    %c0_53 = arith.constant 0 : index
    %c0_54 = arith.constant 0 : index
    %67 = vector.load %arg5[%c0_51, %c1_52, %c0_53, %c0_54] : memref<1x4x2x128xf32, #tpu.memory_space<vmem>>, vector<1x1x2x128xf32>
    %68 = vector.shape_cast %67 : vector<1x1x2x128xf32> to vector<2x128xf32>
    %69 = vector.shape_cast %66 : vector<2x128xf32> to vector<1x1x2x128xf32>
    tpu.vector_store %arg5[%c0_51, %c1_52, %c0_53, %c0_54], %69 {strides = array<i32>} : memref<1x4x2x128xf32, #tpu.memory_space<vmem>>, vector<1x1x2x128xf32>,
    %c0_55 = arith.constant 0 : index
    %c2_56 = arith.constant 2 : index
    %c0_57 = arith.constant 0 : index
    %c0_58 = arith.constant 0 : index
    %70 = vector.load %arg2[%c0_55, %c2_56, %c0_57, %c0_58] : memref<1x4x2x128xf32, #tpu.memory_space<vmem>>, vector<1x1x2x128xf32>
    %71 = vector.shape_cast %70 : vector<1x1x2x128xf32> to vector<2x128xf32>
    %72 = arith.negf %71 : vector<2x128xf32>
    %73 = math.exp %72 : vector<2x128xf32>
    %cst_59 = arith.constant 1.000000e+00 : f32
    %74 = vector.broadcast %cst_59 : f32 to vector<2x128xf32>
    %75 = arith.addf %74, %73 : vector<2x128xf32>
    %76 = arith.divf %74, %75 : vector<2x128xf32>
    %c2_60 = arith.constant 2 : index
    %c2_61 = arith.constant 2 : index
    %77 = memref.load %arg3[%c2_60, %c2_61] : memref<4x4xf32, #tpu.memory_space<smem>>
    %78 = vector.broadcast %77 : f32 to vector<2x128xf32>
    %79 = arith.mulf %71, %78 : vector<2x128xf32>
    %c0_62 = arith.constant 0 : index
    %c0_63 = arith.constant 0 : index
    %c0_64 = arith.constant 0 : index
    %c0_65 = arith.constant 0 : index
    %80 = vector.load %arg2[%c0_62, %c0_63, %c0_64, %c0_65] : memref<1x4x2x128xf32, #tpu.memory_space<vmem>>, vector<1x1x2x128xf32>
    %81 = vector.shape_cast %80 : vector<1x1x2x128xf32> to vector<2x128xf32>
    %c2_66 = arith.constant 2 : index
    %c0_67 = arith.constant 0 : index
    %82 = memref.load %arg3[%c2_66, %c0_67] : memref<4x4xf32, #tpu.memory_space<smem>>
    %83 = vector.broadcast %82 : f32 to vector<2x128xf32>
    %84 = arith.mulf %81, %83 : vector<2x128xf32>
    %85 = arith.addf %79, %84 : vector<2x128xf32>
    %c0_68 = arith.constant 0 : index
    %c1_69 = arith.constant 1 : index
    %c0_70 = arith.constant 0 : index
    %c0_71 = arith.constant 0 : index
    %86 = vector.load %arg2[%c0_68, %c1_69, %c0_70, %c0_71] : memref<1x4x2x128xf32, #tpu.memory_space<vmem>>, vector<1x1x2x128xf32>
    %87 = vector.shape_cast %86 : vector<1x1x2x128xf32> to vector<2x128xf32>
    %c2_72 = arith.constant 2 : index
    %c1_73 = arith.constant 1 : index
    %88 = memref.load %arg3[%c2_72, %c1_73] : memref<4x4xf32, #tpu.memory_space<smem>>
    %89 = vector.broadcast %88 : f32 to vector<2x128xf32>
    %90 = arith.mulf %87, %89 : vector<2x128xf32>
    %91 = arith.addf %85, %90 : vector<2x128xf32>
    %c0_74 = arith.constant 0 : index
    %c3_75 = arith.constant 3 : index
    %c0_76 = arith.constant 0 : index
    %c0_77 = arith.constant 0 : index
    %92 = vector.load %arg2[%c0_74, %c3_75, %c0_76, %c0_77] : memref<1x4x2x128xf32, #tpu.memory_space<vmem>>, vector<1x1x2x128xf32>
    %93 = vector.shape_cast %92 : vector<1x1x2x128xf32> to vector<2x128xf32>
    %c2_78 = arith.constant 2 : index
    %c3_79 = arith.constant 3 : index
    %94 = memref.load %arg3[%c2_78, %c3_79] : memref<4x4xf32, #tpu.memory_space<smem>>
    %95 = vector.broadcast %94 : f32 to vector<2x128xf32>
    %96 = arith.mulf %93, %95 : vector<2x128xf32>
    %97 = arith.addf %91, %96 : vector<2x128xf32>
    %c2_80 = arith.constant 2 : index
    %98 = memref.load %arg4[%c2_80] : memref<4xf32, #tpu.memory_space<smem>>
    %99 = vector.broadcast %98 : f32 to vector<2x128xf32>
    %100 = arith.addf %97, %99 : vector<2x128xf32>
    %101 = arith.mulf %100, %76 : vector<2x128xf32>
    %c0_81 = arith.constant 0 : index
    %c2_82 = arith.constant 2 : index
    %c0_83 = arith.constant 0 : index
    %c0_84 = arith.constant 0 : index
    %102 = vector.load %arg5[%c0_81, %c2_82, %c0_83, %c0_84] : memref<1x4x2x128xf32, #tpu.memory_space<vmem>>, vector<1x1x2x128xf32>
    %103 = vector.shape_cast %102 : vector<1x1x2x128xf32> to vector<2x128xf32>
    %104 = vector.shape_cast %101 : vector<2x128xf32> to vector<1x1x2x128xf32>
    tpu.vector_store %arg5[%c0_81, %c2_82, %c0_83, %c0_84], %104 {strides = array<i32>} : memref<1x4x2x128xf32, #tpu.memory_space<vmem>>, vector<1x1x2x128xf32>,
    %c0_85 = arith.constant 0 : index
    %c3_86 = arith.constant 3 : index
    %c0_87 = arith.constant 0 : index
    %c0_88 = arith.constant 0 : index
    %105 = vector.load %arg2[%c0_85, %c3_86, %c0_87, %c0_88] : memref<1x4x2x128xf32, #tpu.memory_space<vmem>>, vector<1x1x2x128xf32>
    %106 = vector.shape_cast %105 : vector<1x1x2x128xf32> to vector<2x128xf32>
    %107 = arith.negf %106 : vector<2x128xf32>
    %108 = math.exp %107 : vector<2x128xf32>
    %cst_89 = arith.constant 1.000000e+00 : f32
    %109 = vector.broadcast %cst_89 : f32 to vector<2x128xf32>
    %110 = arith.addf %109, %108 : vector<2x128xf32>
    %111 = arith.divf %109, %110 : vector<2x128xf32>
    %c3_90 = arith.constant 3 : index
    %c3_91 = arith.constant 3 : index
    %112 = memref.load %arg3[%c3_90, %c3_91] : memref<4x4xf32, #tpu.memory_space<smem>>
    %113 = vector.broadcast %112 : f32 to vector<2x128xf32>
    %114 = arith.mulf %106, %113 : vector<2x128xf32>
    %c0_92 = arith.constant 0 : index
    %c0_93 = arith.constant 0 : index
    %c0_94 = arith.constant 0 : index
    %c0_95 = arith.constant 0 : index
    %115 = vector.load %arg2[%c0_92, %c0_93, %c0_94, %c0_95] : memref<1x4x2x128xf32, #tpu.memory_space<vmem>>, vector<1x1x2x128xf32>
    %116 = vector.shape_cast %115 : vector<1x1x2x128xf32> to vector<2x128xf32>
    %c3_96 = arith.constant 3 : index
    %c0_97 = arith.constant 0 : index
    %117 = memref.load %arg3[%c3_96, %c0_97] : memref<4x4xf32, #tpu.memory_space<smem>>
    %118 = vector.broadcast %117 : f32 to vector<2x128xf32>
    %119 = arith.mulf %116, %118 : vector<2x128xf32>
    %120 = arith.addf %114, %119 : vector<2x128xf32>
    %c0_98 = arith.constant 0 : index
    %c1_99 = arith.constant 1 : index
    %c0_100 = arith.constant 0 : index
    %c0_101 = arith.constant 0 : index
    %121 = vector.load %arg2[%c0_98, %c1_99, %c0_100, %c0_101] : memref<1x4x2x128xf32, #tpu.memory_space<vmem>>, vector<1x1x2x128xf32>
    %122 = vector.shape_cast %121 : vector<1x1x2x128xf32> to vector<2x128xf32>
    %c3_102 = arith.constant 3 : index
    %c1_103 = arith.constant 1 : index
    %123 = memref.load %arg3[%c3_102, %c1_103] : memref<4x4xf32, #tpu.memory_space<smem>>
    %124 = vector.broadcast %123 : f32 to vector<2x128xf32>
    %125 = arith.mulf %122, %124 : vector<2x128xf32>
    %126 = arith.addf %120, %125 : vector<2x128xf32>
    %c0_104 = arith.constant 0 : index
    %c2_105 = arith.constant 2 : index
    %c0_106 = arith.constant 0 : index
    %c0_107 = arith.constant 0 : index
    %127 = vector.load %arg2[%c0_104, %c2_105, %c0_106, %c0_107] : memref<1x4x2x128xf32, #tpu.memory_space<vmem>>, vector<1x1x2x128xf32>
    %128 = vector.shape_cast %127 : vector<1x1x2x128xf32> to vector<2x128xf32>
    %c3_108 = arith.constant 3 : index
    %c2_109 = arith.constant 2 : index
    %129 = memref.load %arg3[%c3_108, %c2_109] : memref<4x4xf32, #tpu.memory_space<smem>>
    %130 = vector.broadcast %129 : f32 to vector<2x128xf32>
    %131 = arith.mulf %128, %130 : vector<2x128xf32>
    %132 = arith.addf %126, %131 : vector<2x128xf32>
    %c3_110 = arith.constant 3 : index
    %133 = memref.load %arg4[%c3_110] : memref<4xf32, #tpu.memory_space<smem>>
    %134 = vector.broadcast %133 : f32 to vector<2x128xf32>
    %135 = arith.addf %132, %134 : vector<2x128xf32>
    %136 = arith.mulf %135, %111 : vector<2x128xf32>
    %c0_111 = arith.constant 0 : index
    %c3_112 = arith.constant 3 : index
    %c0_113 = arith.constant 0 : index
    %c0_114 = arith.constant 0 : index
    %137 = vector.load %arg5[%c0_111, %c3_112, %c0_113, %c0_114] : memref<1x4x2x128xf32, #tpu.memory_space<vmem>>, vector<1x1x2x128xf32>
    %138 = vector.shape_cast %137 : vector<1x1x2x128xf32> to vector<2x128xf32>
    %139 = vector.shape_cast %136 : vector<2x128xf32> to vector<1x1x2x128xf32>
    tpu.vector_store %arg5[%c0_111, %c3_112, %c0_113, %c0_114], %139 {strides = array<i32>} : memref<1x4x2x128xf32, #tpu.memory_space<vmem>>, vector<1x1x2x128xf32>,
    return
  }
  func.func @transform_0(%arg0: i32, %arg1: i32) -> (i32, i32, i32, i32) {
    %c0_i32 = arith.constant 0 : i32
    %c0_i32_0 = arith.constant 0 : i32
    %c0_i32_1 = arith.constant 0 : i32
    return %arg0, %c0_i32, %arg1, %c0_i32_0 : i32, i32, i32, i32
  }
  func.func @transform_1(%arg0: i32, %arg1: i32) -> (i32, i32) {
    %c0_i32 = arith.constant 0 : i32
    %c0_i32_0 = arith.constant 0 : i32
    %c0_i32_1 = arith.constant 0 : i32
    return %c0_i32, %c0_i32_0 : i32, i32
  }
  func.func @transform_2(%arg0: i32, %arg1: i32) -> i32 {
    %c0_i32 = arith.constant 0 : i32
    %c0_i32_0 = arith.constant 0 : i32
    return %c0_i32 : i32
  }
  func.func @transform_3(%arg0: i32, %arg1: i32) -> (i32, i32, i32, i32) {
    %c0_i32 = arith.constant 0 : i32
    %c0_i32_0 = arith.constant 0 : i32
    %c0_i32_1 = arith.constant 0 : i32
    return %arg0, %c0_i32, %arg1, %c0_i32_0 : i32, i32, i32, i32
  }
}

</mosaic_0001>

<llo_original>
// kernel: glu_forward.1
$region0: #{glu_forward.1}
  #allocation0 [shape = 'u32[]', space=smem, size = 0x4, offset = 0x4, fixed_abs, tag = 'smem constant byte address 0x4 - core index']
  #allocation1 [shape = 'u32[144,128]{1,0:T(1,128)}', space=vmem, size = 0x12000, scoped, tag = 'internal scratch']
  %s0 = inlined_call_operand.vmem [shape: f32[2,4,2,128], index: 0, kind: input, shape index: {}]
  %s1 = inlined_call_operand.vmem [shape: f32[4,4], index: 1, kind: input, shape index: {}]
  %s2 = inlined_call_operand.vmem [shape: f32[4], index: 2, kind: input, shape index: {}]
  %s3 = inlined_call_operand.vmem [shape: f32[2,4,2,128], index: 3, kind: output, shape index: {}]
  %s4 = sld [smem:[#allocation0]]
  $region53: #{glu_forward.1} parent=0
    _
  %s6 = ssub.s32 1, %s4
  %s7 = scalar_select 0, %s6, %s4
  $region1: #{glu_forward.1} parent=0
    #allocation2 [shape = 'u8[2048]{0}', space=smem, size = 0x800, scoped, tag = 'input window, operand 1, single buffered']
    #allocation3 [shape = 's32[2]{0}', space=sflag, size = 0x8, scoped, tag = 'scoped memory for glu_forward.1']
    #allocation4 [shape = 'u8[512]{0}', space=smem, size = 0x200, scoped, tag = 'input window, operand 2, single buffered']
    #allocation5 [shape = 's32[1]{0}', space=sflag, size = 0x4, scoped, tag = 'scoped memory for glu_forward.1']
    %8 = vsyncpa [#allocation3], 0
    %9 = vsyncpa [#allocation5], 0
    loop: start=0, step=1, limit=4
    $region2: #{glu_forward.1} parent=1 // loop_pre_header
      _
    $region3: #{glu_forward.1} parent=1 // loop_header
      %s11 = sphi 0, %s15
      %p12 = scmp.ge.s32.totalorder %s11, 4
      %s18 = sphi 0, %s30
      %s19 = sphi 0, %s26
      %s20 = sphi 0, %s18
      %s21 = sphi 0, %s19
      %s22 = sphi 0, %s20
      %s23 = sphi 0, %s21
      %s35 = sphi 0, %s37
      %s38 = sphi 0, %s35
      %s39 = sphi 0, %s38
      %s55 = sphi 0, %s39
      %s59 = sphi 0, %s59
      %s61 = sphi 0, %s59
      %s62 = sphi 0, %s61
      %s76 = sphi 0, %s62
      %s80 = sphi 0, %s80
      %s82 = sphi 0, %s80
      %s83 = sphi 0, %s82
      %s97 = sphi 0, %s83
      %s105 = sphi 0, %s107
      %s108 = sphi 0, %s105
      %s109 = sphi 0, %s108
      %s125 = sphi 0, %s109
    $region4: #{glu_forward.1} parent=1 // loop_header_branch
      %14 = sbr.rel (%p12) target = $region8
    $region5: #{glu_forward.1} parent=1 // loop_body
      %s16 = ssub.s32 %s11, 1
      %s17 = ssub.s32 %s11, 2
      %s24 = sadd.s32 1, %s19
      %p25 = scmp.ge.s32.totalorder %s24, 1
      %s26 = scalar_select %p25, 0, %s24
      %s27 = sadd.s32 1, %s18
      %s28 = scalar_select %p25, %s27, %s18
      %p29 = scmp.ge.s32.totalorder %s28, 2
      %s30 = scalar_select %p29, 0, %s28
      %s31 = ssub.s32 %s18, %s30
      %s32 = ssub.s32 %s19, %s26
      %s33 = sor.u32 %s31, %s32
      %p34 = scmp.eq.s32.totalorder %s33, 0
      %s36 = sadd.s32 %s35, 1
      %s37 = scalar_select %p34, %s35, %s36
      %p40 = pneg %p34
      %p41 = scmp.eq.s32.totalorder %s11, 1
      %p42 = por %p40, %p41
      %p43 = scmp.ne.s32.totalorder %s35, %s38
      %p44 = scmp.eq.s32.totalorder %s11, 0
      %p45 = por %p43, %p44
      %p46 = scmp.ne.s32.totalorder %s35, %s38
      %p47 = scmp.eq.s32.totalorder %s16, 1
      %p48 = por %p46, %p47
      %p49 = scmp.ne.s32.totalorder %s38, %s39
      %p50 = scmp.eq.s32.totalorder %s16, 0
      %p51 = por %p49, %p50
      %p52 = scmp.ne.s32.totalorder %s38, %s39
      %p53 = scmp.eq.s32.totalorder %s17, 1
      %p54 = por %p52, %p53
      %p56 = scmp.ne.s32.totalorder %s39, %s55
      %p57 = scmp.eq.s32.totalorder %s17, 0
      %p58 = por %p56, %p57
      %s60 = sadd.s32 %s59, 1
      %p63 = scmp.eq.s32.totalorder %s11, 1
      %p64 = scmp.ne.s32.totalorder %s59, %s61
      %p65 = scmp.eq.s32.totalorder %s11, 0
      %p66 = por %p64, %p65
      %p67 = scmp.ne.s32.totalorder %s59, %s61
      %p68 = scmp.eq.s32.totalorder %s16, 1
      %p69 = por %p67, %p68
      %p70 = scmp.ne.s32.totalorder %s61, %s62
      %p71 = scmp.eq.s32.totalorder %s16, 0
      %p72 = por %p70, %p71
      %p73 = scmp.ne.s32.totalorder %s61, %s62
      %p74 = scmp.eq.s32.totalorder %s17, 1
      %p75 = por %p73, %p74
      %p77 = scmp.ne.s32.totalorder %s62, %s76
      %p78 = scmp.eq.s32.totalorder %s17, 0
      %p79 = por %p77, %p78
      %s81 = sadd.s32 %s80, 1
      %p84 = scmp.eq.s32.totalorder %s11, 1
      %p85 = scmp.ne.s32.totalorder %s80, %s82
      %p86 = scmp.eq.s32.totalorder %s11, 0
      %p87 = por %p85, %p86
      %p88 = scmp.ne.s32.totalorder %s80, %s82
      %p89 = scmp.eq.s32.totalorder %s16, 1
      %p90 = por %p88, %p89
      %p91 = scmp.ne.s32.totalorder %s82, %s83
      %p92 = scmp.eq.s32.totalorder %s16, 0
      %p93 = por %p91, %p92
      %p94 = scmp.ne.s32.totalorder %s82, %s83
      %p95 = scmp.eq.s32.totalorder %s17, 1
      %p96 = por %p94, %p95
      %p98 = scmp.ne.s32.totalorder %s83, %s97
      %p99 = scmp.eq.s32.totalorder %s17, 0
      %p100 = por %p98, %p99
      %s101 = ssub.s32 %s18, %s30
      %s102 = ssub.s32 %s19, %s26
      %s103 = sor.u32 %s101, %s102
      %p104 = scmp.eq.s32.totalorder %s103, 0
      %s106 = sadd.s32 %s105, 1
      %s107 = scalar_select %p104, %s105, %s106
      %p110 = pneg %p104
      %p111 = scmp.eq.s32.totalorder %s11, 1
      %p112 = por %p110, %p111
      %p113 = scmp.ne.s32.totalorder %s105, %s108
      %p114 = scmp.eq.s32.totalorder %s11, 0
      %p115 = por %p113, %p114
      %p116 = scmp.ne.s32.totalorder %s105, %s108
      %p117 = scmp.eq.s32.totalorder %s16, 1
      %p118 = por %p116, %p117
      %p119 = scmp.ne.s32.totalorder %s108, %s109
      %p120 = scmp.eq.s32.totalorder %s16, 0
      %p121 = por %p119, %p120
      %p122 = scmp.ne.s32.totalorder %s108, %s109
      %p123 = scmp.eq.s32.totalorder %s17, 1
      %p124 = por %p122, %p123
      %p126 = scmp.ne.s32.totalorder %s109, %s125
      %p127 = scmp.eq.s32.totalorder %s17, 0
      %p128 = por %p126, %p127
      %p129 = scmp.le.s32.totalorder 1, %s11
      %p130 = scmp.lt.s32.totalorder %s11, 3
      %p131 = pnand %p129, %p130
      %p132 = pneg %p131
      // Predicated region
      $region9: #{glu_forward.1} parent=5 // pred_check
        _
      $region10: #{glu_forward.1} parent=5 // pred_check_branch
        %134 = sbr.rel (%p131) target = $region12
      $region11: #{glu_forward.1} parent=5 // pred_region
        %s135 = ssub.s32 %s11, 1
        // Predicated region
        $region13: #{glu_forward.1} parent=11 // pred_check
          %p136 = pneg %p72
        $region14: #{glu_forward.1} parent=11 // pred_check_branch
          %138 = sbr.rel (%p136) target = $region16
        $region15: #{glu_forward.1} parent=11 // pred_region
          %s140 = ssub.s32 64, 64
          %141 = vsyncadd [#allocation3], %s140
          %s143 = sshll.u32 %s1, 4
          %s144 = int_to_ptr.vmem [resolvable:$true] %s143
          %146 = dma.vmem_to_smem %s144, 64, [#allocation2], [#allocation3]
        $region16: #{glu_forward.1} parent=11 // pred_fallthru
          _
        // Predicated region
        $region17: #{glu_forward.1} parent=11 // pred_check
          %p147 = pneg %p93
        $region18: #{glu_forward.1} parent=11 // pred_check_branch
          %149 = sbr.rel (%p147) target = $region20
        $region19: #{glu_forward.1} parent=11 // pred_region
          %s151 = ssub.s32 16, 16
          %152 = vsyncadd [#allocation5], %s151
          %s154 = sshll.u32 %s2, 4
          %s155 = int_to_ptr.vmem [resolvable:$true] %s154
          %157 = dma.vmem_to_smem %s155, 16, [#allocation4], [#allocation5]
        $region20: #{glu_forward.1} parent=11 // pred_fallthru
          _
      $region12: #{glu_forward.1} parent=5 // pred_fallthru
        _
      %p158 = scmp.lt.s32.totalorder %s11, 2
      // Predicated region
      $region21: #{glu_forward.1} parent=5 // pred_check
        %p159 = pneg %p158
      $region22: #{glu_forward.1} parent=5 // pred_check_branch
        %161 = sbr.rel (%p159) target = $region24
      $region23: #{glu_forward.1} parent=5 // pred_region
        // Predicated region
        $region25: #{glu_forward.1} parent=23 // pred_check
          %p162 = pneg %p45
        $region26: #{glu_forward.1} parent=23 // pred_check_branch
          %164 = sbr.rel (%p162) target = $region28
        $region27: #{glu_forward.1} parent=23 // pred_region
          %p165 = scmp.lt.s32.totalorder %s18, 1
          %s166 = scalar_select %p165, %s18, 1
          %p167 = scmp.lt.s32.totalorder %s19, 0
          %s168 = scalar_select %p167, %s19, 0
          %s169 = smul.addr %s166, 4
          %s170 = sadd.s32 %s168, %s169
          %s171 = smul.addr %s170, 2
          %s172 = scalar_lea.vmem %s0, %s171
        $region28: #{glu_forward.1} parent=23 // pred_fallthru
          _
      $region24: #{glu_forward.1} parent=5 // pred_fallthru
        _
      %p173 = scmp.le.s32.totalorder 1, %s11
      %p174 = scmp.lt.s32.totalorder %s11, 3
      %p175 = pnand %p173, %p174
      %p176 = pneg %p175
      // Predicated region
      $region29: #{glu_forward.1} parent=5 // pred_check
        _
      $region30: #{glu_forward.1} parent=5 // pred_check_branch
        %178 = sbr.rel (%p175) target = $region32
      $region31: #{glu_forward.1} parent=5 // pred_region
        %s179 = ssub.s32 %s11, 1
        // Predicated region
        $region33: #{glu_forward.1} parent=31 // pred_check
          %p180 = pneg %p72
        $region34: #{glu_forward.1} parent=31 // pred_check_branch
          %182 = sbr.rel (%p180) target = $region36
        $region35: #{glu_forward.1} parent=31 // pred_region
          %183 = dma.done [#allocation3], 64
        $region36: #{glu_forward.1} parent=31 // pred_fallthru
          _
        // Predicated region
        $region37: #{glu_forward.1} parent=31 // pred_check
          %p184 = pneg %p93
        $region38: #{glu_forward.1} parent=31 // pred_check_branch
          %186 = sbr.rel (%p184) target = $region40
        $region39: #{glu_forward.1} parent=31 // pred_region
          %187 = dma.done [#allocation5], 16
        $region40: #{glu_forward.1} parent=31 // pred_fallthru
          _
        %188 = sfence
        %p189 = scmp.lt.s32.totalorder %s20, 1
        %s190 = scalar_select %p189, %s20, 1
        %p191 = scmp.lt.s32.totalorder %s21, 0
        %s192 = scalar_select %p191, %s21, 0
        %s193 = smul.addr %s190, 4
        %s194 = sadd.s32 %s192, %s193
        %s195 = smul.addr %s194, 2
        %s196 = scalar_lea.vmem %s0, %s195
        %p197 = pneg %p51
        %p198 = pneg %p48
        %p199 = pneg %p72
        %p200 = pneg %p69
        %p201 = pneg %p93
        %p202 = pneg %p90
        %p203 = pneg %p121
        %p204 = pneg %p118
        %p205 = scmp.lt.s32.totalorder %s20, 1
        %s206 = scalar_select %p205, %s20, 1
        %p207 = scmp.lt.s32.totalorder %s21, 0
        %s208 = scalar_select %p207, %s21, 0
        %s209 = smul.addr %s206, 4
        %s210 = sadd.s32 %s208, %s209
        %s211 = smul.addr %s210, 2
        %s212 = scalar_lea.vmem %s3, %s211
        %p213 = scmp.lt.s32.totalorder %s20, 1
        %s214 = scalar_select %p213, %s20, 1
        %p215 = scmp.lt.s32.totalorder %s21, 0
        %s216 = scalar_select %p215, %s21, 0
        %s217 = smul.addr %s214, 4
        %s218 = sadd.s32 %s216, %s217
        %s219 = smul.addr %s218, 2
        %s220 = scalar_lea.vmem %s0, %s219
        %p221 = scmp.lt.s32.totalorder %s20, 1
        %s222 = scalar_select %p221, %s20, 1
        %p223 = scmp.lt.s32.totalorder %s21, 0
        %s224 = scalar_select %p223, %s21, 0
        %s225 = smul.addr %s222, 4
        %s226 = sadd.s32 %s224, %s225
        %s227 = smul.addr %s226, 2
        %s228 = scalar_lea.vmem %s3, %s227
        %v229 = vld [vmem:[%s220] sm:$0x3]
        %v230 = vxor.u32 %v229, 2147483648
        %v231 = vmul.f32 %v230, 1.442695
        %v232 = vpow.pop %v231
        %v233 = vadd.f32 %v232, 1.0
        %v234 = vrcp.pop %v233
        %v235 = vmul.f32 1.0, %v234
        %s236 = sld [smem:[#allocation2]]
        %v237 = vstv %s236
        %v238 = vmul.f32 %v229, %v237
        %s239 = scalar_lea.vmem %s220, 2
        %v240 = vld [vmem:[%s239] sm:$0x3]
        %s241 = sld [smem:[#allocation2 + $0x1]]
        %v242 = vstv %s241
        %v243 = vmul.f32 %v240, %v242
        %v244 = vadd.f32 %v238, %v243
        %s245 = scalar_lea.vmem %s220, 4
        %v246 = vld [vmem:[%s245] sm:$0x3]
        %s247 = sld [smem:[#allocation2 + $0x2]]
        %v248 = vstv %s247
        %v249 = vmul.f32 %v246, %v248
        %v250 = vadd.f32 %v244, %v249
        %s251 = scalar_lea.vmem %s220, 6
        %v252 = vld [vmem:[%s251] sm:$0x3]
        %s253 = sld [smem:[#allocation2 + $0x3]]
        %v254 = vstv %s253
        %v255 = vmul.f32 %v252, %v254
        %v256 = vadd.f32 %v250, %v255
        %s257 = sld [smem:[#allocation4]]
        %v258 = vstv %s257
        %v259 = vadd.f32 %v256, %v258
        %v260 = vmul.f32 %v259, %v235
        %261 = vst [vmem:[%s228] sm:$0x3] %v260
        %v262 = vld [vmem:[%s239] sm:$0x3]
        %v263 = vxor.u32 %v262, 2147483648
        %v264 = vmul.f32 %v263, 1.442695
        %v265 = vpow.pop %v264
        %v266 = vadd.f32 %v265, 1.0
        %v267 = vrcp.pop %v266
        %v268 = vmul.f32 1.0, %v267
        %s269 = sld [smem:[#allocation2 + $0x81]]
        %v270 = vstv %s269
        %v271 = vmul.f32 %v262, %v270
        %v272 = vld [vmem:[%s220] sm:$0x3]
        %s273 = sld [smem:[#allocation2 + $0x80]]
        %v274 = vstv %s273
        %v275 = vmul.f32 %v272, %v274
        %v276 = vadd.f32 %v271, %v275
        %v277 = vld [vmem:[%s245] sm:$0x3]
        %s278 = sld [smem:[#allocation2 + $0x82]]
        %v279 = vstv %s278
        %v280 = vmul.f32 %v277, %v279
        %v281 = vadd.f32 %v276, %v280
        %v282 = vld [vmem:[%s251] sm:$0x3]
        %s283 = sld [smem:[#allocation2 + $0x83]]
        %v284 = vstv %s283
        %v285 = vmul.f32 %v282, %v284
        %v286 = vadd.f32 %v281, %v285
        %s287 = sld [smem:[#allocation4 + $0x1]]
        %v288 = vstv %s287
        %v289 = vadd.f32 %v286, %v288
        %v290 = vmul.f32 %v289, %v268
        %s291 = scalar_lea.vmem %s228, 2
        %292 = vst [vmem:[%s291] sm:$0x3] %v290
        %v293 = vld [vmem:[%s245] sm:$0x3]
        %v294 = vxor.u32 %v293, 2147483648
        %v295 = vmul.f32 %v294, 1.442695
        %v296 = vpow.pop %v295
        %v297 = vadd.f32 %v296, 1.0
        %v298 = vrcp.pop %v297
        %v299 = vmul.f32 1.0, %v298
        %s300 = sld [smem:[#allocation2 + $0x102]]
        %v301 = vstv %s300
        %v302 = vmul.f32 %v293, %v301
        %v303 = vld [vmem:[%s220] sm:$0x3]
        %s304 = sld [smem:[#allocation2 + $0x100]]
        %v305 = vstv %s304
        %v306 = vmul.f32 %v303, %v305
        %v307 = vadd.f32 %v302, %v306
        %v308 = vld [vmem:[%s239] sm:$0x3]
        %s309 = sld [smem:[#allocation2 + $0x101]]
        %v310 = vstv %s309
        %v311 = vmul.f32 %v308, %v310
        %v312 = vadd.f32 %v307, %v311
        %v313 = vld [vmem:[%s251] sm:$0x3]
        %s314 = sld [smem:[#allocation2 + $0x103]]
        %v315 = vstv %s314
        %v316 = vmul.f32 %v313, %v315
        %v317 = vadd.f32 %v312, %v316
        %s318 = sld [smem:[#allocation4 + $0x2]]
        %v319 = vstv %s318
        %v320 = vadd.f32 %v317, %v319
        %v321 = vmul.f32 %v320, %v299
        %s322 = scalar_lea.vmem %s228, 4
        %323 = vst [vmem:[%s322] sm:$0x3] %v321
        %v324 = vld [vmem:[%s251] sm:$0x3]
        %v325 = vxor.u32 %v324, 2147483648
        %v326 = vmul.f32 %v325, 1.442695
        %v327 = vpow.pop %v326
        %v328 = vadd.f32 %v327, 1.0
        %v329 = vrcp.pop %v328
        %v330 = vmul.f32 1.0, %v329
        %s331 = sld [smem:[#allocation2 + $0x183]]
        %v332 = vstv %s331
        %v333 = vmul.f32 %v324, %v332
        %v334 = vld [vmem:[%s220] sm:$0x3]
        %s335 = sld [smem:[#allocation2 + $0x180]]
        %v336 = vstv %s335
        %v337 = vmul.f32 %v334, %v336
        %v338 = vadd.f32 %v333, %v337
        %v339 = vld [vmem:[%s239] sm:$0x3]
        %s340 = sld [smem:[#allocation2 + $0x181]]
        %v341 = vstv %s340
        %v342 = vmul.f32 %v339, %v341
        %v343 = vadd.f32 %v338, %v342
        %v344 = vld [vmem:[%s245] sm:$0x3]
        %s345 = sld [smem:[#allocation2 + $0x182]]
        %v346 = vstv %s345
        %v347 = vmul.f32 %v344, %v346
        %v348 = vadd.f32 %v343, %v347
        %s349 = sld [smem:[#allocation4 + $0x3]]
        %v350 = vstv %s349
        %v351 = vadd.f32 %v348, %v350
        %v352 = vmul.f32 %v351, %v330
        %s353 = scalar_lea.vmem %s228, 6
        %354 = vst [vmem:[%s353] sm:$0x3] %v352
        %p355 = scmp.lt.s32.totalorder %s20, 1
        %s356 = scalar_select %p355, %s20, 1
        %p357 = scmp.lt.s32.totalorder %s21, 0
        %s358 = scalar_select %p357, %s21, 0
        %s359 = smul.addr %s356, 4
        %s360 = sadd.s32 %s358, %s359
        %s361 = smul.addr %s360, 2
        %s362 = scalar_lea.vmem %s3, %s361
        // Predicated region
        $region41: #{glu_forward.1} parent=31 // pred_check
          %p363 = pneg %p118
        $region42: #{glu_forward.1} parent=31 // pred_check_branch
          %365 = sbr.rel (%p363) target = $region44
        $region43: #{glu_forward.1} parent=31 // pred_region
          _
        $region44: #{glu_forward.1} parent=31 // pred_fallthru
          _
      $region32: #{glu_forward.1} parent=5 // pred_fallthru
        _
      %p366 = scmp.le.s32.totalorder 2, %s11
      // Predicated region
      $region45: #{glu_forward.1} parent=5 // pred_check
        %p367 = pneg %p366
      $region46: #{glu_forward.1} parent=5 // pred_check_branch
        %369 = sbr.rel (%p367) target = $region48
      $region47: #{glu_forward.1} parent=5 // pred_region
        %s370 = ssub.s32 %s11, 2
        // Predicated region
        $region49: #{glu_forward.1} parent=47 // pred_check
          %p371 = pneg %p124
        $region50: #{glu_forward.1} parent=47 // pred_check_branch
          %373 = sbr.rel (%p371) target = $region52
        $region51: #{glu_forward.1} parent=47 // pred_region
          %p374 = scmp.lt.s32.totalorder %s22, 1
          %s375 = scalar_select %p374, %s22, 1
          %p376 = scmp.lt.s32.totalorder %s23, 0
          %s377 = scalar_select %p376, %s23, 0
          %s378 = smul.addr %s375, 4
          %s379 = sadd.s32 %s377, %s378
          %s380 = smul.addr %s379, 2
          %s381 = scalar_lea.vmem %s3, %s380
        $region52: #{glu_forward.1} parent=47 // pred_fallthru
          _
      $region48: #{glu_forward.1} parent=5 // pred_fallthru
        _
    $region6: #{glu_forward.1} parent=1 // loop_footer
      %s15 = sadd.s32 1, %s11
    $region7: #{glu_forward.1} parent=1 // loop_footer_branch
      %10 = sbr.rel target = $region3
    $region8: #{glu_forward.1} parent=1 // loop_exit
      _
    %382 = vsyncpa [#allocation3], 1
    %s383 = scalar_lea.sflag [#allocation3], 1
    %384 = vsyncpa %s383, 1
    %385 = vsyncpa [#allocation5], 1

</llo_original>
